<compile_context>
chip_gen: v5e
topology: v5e:2x2
jax: 0.10.0
libtpu: 0.0.40
codegen_flags: <defaults>
</compile_context>

<pallas_src>
import math
import functools

import jax
import jax.numpy as jnp
from jax.experimental import pallas as pl
from jax.experimental.pallas import tpu as pltpu


# ---------------------------------------------------------------------------
# Parameter construction (deterministic JAX equivalent of the torch __init__).
# Init-time host code, not part of the forward kernel.
# ---------------------------------------------------------------------------
def gamma_shape_rate_from_mean_stddev(mean, stddev):
    rate = mean / stddev ** 2.0
    shape = mean * rate
    return shape, rate


def draw_gaussian_vectors_by_scale_distribution(key, ndim, nsamples, scale_mean, scale_stddev):
    """Per-sample Gamma-drawn rbf scale, then a N(0, 1/scale) vector of length ndim."""
    if nsamples == 0:
        return jnp.zeros((ndim, nsamples), jnp.float32)
    shape, rate = gamma_shape_rate_from_mean_stddev(scale_mean, scale_stddev)
    k_scale, k_gauss = jax.random.split(key)
    rbf_scales = jax.random.gamma(k_scale, shape, (nsamples,), jnp.float32) / rate
    normals = jax.random.normal(k_gauss, (ndim, nsamples), jnp.float32)
    return (normals / rbf_scales[None, :]).astype(jnp.float32)


# ---------------------------------------------------------------------------
# Fused, scaled sincos on the VPU (shared Cody-Waite range reduction).
# Valid to ~1e-7 absolute for |x| up to a few thousand; the scale factor is
# folded into the quadrant sign selection.
# ---------------------------------------------------------------------------
_TWO_OVER_PI = 0.6366197723675814
# pi/2 split (2x the Cephes pi/4 split) -> exact q*Pk products for |q| << 2^15.
_PIO2_1 = 1.5703125
_PIO2_2 = 4.837512969970703125e-4
_PIO2_3 = 7.54978995489188216e-8
# Minimax polynomials on [-pi/4, pi/4] (Cephes single-precision coefficients).
_SIN_C1 = -1.6666654611e-1
_SIN_C2 = 8.3321608736e-3
_SIN_C3 = -1.9515295891e-4
_COS_C1 = 4.166664568298827e-2
_COS_C2 = -1.388731625493765e-3
_COS_C3 = 2.443315711809948e-5


def _sincos_scaled(x, scale):
    """Returns (scale*cos(x), scale*sin(x)) with one shared range reduction."""
    q = jnp.floor(x * _TWO_OVER_PI + 0.5)           # nearest multiple of pi/2
    r = x - q * _PIO2_1
    r = r - q * _PIO2_2
    r = r - q * _PIO2_3                              # r in ~[-pi/4, pi/4]
    r2 = r * r

    sp = _SIN_C3
    sp = sp * r2 + _SIN_C2
    sp = sp * r2 + _SIN_C1
    sin_r = r + r * (r2 * sp)

    cp = _COS_C3
    cp = cp * r2 + _COS_C2
    cp = cp * r2 + _COS_C1
    cos_r = 1.0 - 0.5 * r2 + (r2 * r2) * cp

    # Quadrant handling: qm = q mod 4 (computed in float, robust for negatives).
    qm = q - 4.0 * jnp.floor(q * 0.25)
    swap = jnp.logical_or(qm == 1.0, qm == 3.0)       # odd quadrant: sin<->cos
    sin_neg = qm >= 2.0                               # quadrants 2,3
    cos_neg = jnp.logical_or(qm == 1.0, qm == 2.0)    # quadrants 1,2

    s_sign = jnp.where(sin_neg, -scale, scale)        # scale folded into signs
    c_sign = jnp.where(cos_neg, -scale, scale)
    sin_x = s_sign * jnp.where(swap, cos_r, sin_r)
    cos_x = c_sign * jnp.where(swap, sin_r, cos_r)
    return cos_x, sin_x


# ---------------------------------------------------------------------------
# Pallas kernel. Compute is lane-dense (rows on lanes); the result tile is
# transposed on the XLU and stored in the module's natural [rows, enc_dim]
# layout so no post-kernel XLA transpose is needed.
# ---------------------------------------------------------------------------
def _rff_kernel(gvt_ref, coords_ref, out_ref, *, nsamples, pos_dim, scale):
    # gvt_ref:    (nsamples, pos_dim)   tiny, same block every grid step
    # coords_ref: (pos_dim, TN)         coordinate rows on lanes
    # out_ref:    (TN, 2*nsamples)      natural output layout
    gvt = gvt_ref[...]
    c = coords_ref[...]

    # Unrolled K = pos_dim contraction on the VPU (MXU irrelevant at K=3, N=16).
    ips = gvt[:, 0:1] * c[0:1, :]
    for k in range(1, pos_dim):
        ips = ips + gvt[:, k:k + 1] * c[k:k + 1, :]

    cos_v, sin_v = _sincos_scaled(ips, scale)

    # (2*nsamples, TN) lane-dense result; concat is sublane-aligned when
    # nsamples % 8 == 0 (true for typical encoding dims, e.g. 32 -> 16).
    feat_t = jnp.concatenate([cos_v, sin_v], axis=0)

    # XLU transpose -> (TN, 2*nsamples); single full-block store, contiguous
    # HBM writeback (block spans the whole last dim).
    out_ref[...] = feat_t.T.astype(out_ref.dtype)


def _pick_lane_tile(n_rows, tile_cols):
    """128-lane-aligned tile, split into >=2 blocks when possible (v7x 2 TCs)."""
    if n_rows <= 128:
        return 128
    half = ((n_rows + 1) // 2 + 127) // 128 * 128
    return max(128, min(tile_cols, half))


def rff_position_encode(coords, gaussian_vectors, *, tile_cols=4096, out_dtype=jnp.float32):
    """coords: [B, V, position_dim]
       gaussian_vectors: [position_dim, nsamples] float32
       returns: [B, V, 2*nsamples] (out_dtype, float32 by default)."""
    B, V, pos_dim = coords.shape
    pd, nsamples = gaussian_vectors.shape
    assert pd == pos_dim
    if nsamples == 0:
        # Degenerate case: feat = coords @ G with zero columns (float32 like main path).
        return jnp.zeros((B, V, 0), jnp.float32)
    assert tile_cols % 128 == 0, "tile_cols must be a multiple of 128 lanes"

    enc_dim = 2 * nsamples
    n_rows = B * V

    # Lane-dense compute layout: rows -> lanes.  Tiny wrapper transpose
    # (12 B/row); the big output transpose is done in-kernel instead.
    coords_t = coords.reshape(n_rows, pos_dim).astype(jnp.float32).T  # (pos_dim, n_rows)
    gvt = gaussian_vectors.astype(jnp.float32).T                      # (nsamples, pos_dim)

    tn = _pick_lane_tile(n_rows, tile_cols)
    grid = (pl.cdiv(n_rows, tn),)

    scale = math.sqrt(1.0 / nsamples)

    # ~45 VALU ops/element for the fused sincos + 2*pos_dim for the contraction.
    cost = pl.CostEstimate(
        flops=n_rows * nsamples * (2 * pos_dim + 45),
        transcendentals=0,
        bytes_accessed=4 * (n_rows * pos_dim + pos_dim * nsamples)
        + jnp.dtype(out_dtype).itemsize * n_rows * enc_dim,
    )

    out = pl.pallas_call(
        functools.partial(_rff_kernel, nsamples=nsamples, pos_dim=pos_dim, scale=scale),
        out_shape=jax.ShapeDtypeStruct((n_rows, enc_dim), out_dtype),
        grid_spec=pltpu.PrefetchScalarGridSpec(
            num_scalar_prefetch=0,
            grid=grid,
            in_specs=[
                pl.BlockSpec((nsamples, pos_dim), lambda i: (0, 0)),  # gaussian vectors^T
                pl.BlockSpec((pos_dim, tn), lambda i: (0, i)),        # coords^T lane tile
            ],
            out_specs=pl.BlockSpec((tn, enc_dim), lambda i: (i, 0)),  # natural layout
        ),
        compiler_params=pltpu.CompilerParams(
            dimension_semantics=("parallel",),
            vmem_limit_bytes=32 * 1024 * 1024,
        ),
        cost_estimate=cost,
    )(gvt, coords_t)

    # Pure metadata reshape (contiguous), no data movement.
    return out.reshape(B, V, enc_dim)


# ---------------------------------------------------------------------------
# Pure-JAX reference for validation
# ---------------------------------------------------------------------------
def rff_reference(coords, gaussian_vectors):
    nsamples = gaussian_vectors.shape[1]
    ips = jnp.einsum(
        "bvk,kn->bvn",
        coords.astype(jnp.float32),
        gaussian_vectors.astype(jnp.float32),
        precision=jax.lax.Precision.HIGHEST,
    )
    if nsamples == 0:
        return ips
    scale = math.sqrt(1.0 / nsamples)
    return scale * jnp.concatenate((jnp.cos(ips), jnp.sin(ips)), axis=-1)


if __name__ == "__main__":
    key = jax.random.PRNGKey(0)
    k_param, k_c1, k_c2, k_c3 = jax.random.split(key, 4)

    # Module config: position_dim=3, encoding_dim=32 -> nsamples=16
    position_dim = 3
    encoding_dim = 32
    scale_mean = 1.0
    scale_stddev = 0.5
    num_vectors = encoding_dim // 2

    gaussian_vectors = draw_gaussian_vectors_by_scale_distribution(
        k_param, position_dim, num_vectors, scale_mean, scale_stddev)

    # Case 1: small coords [2, 16, 3] -> 32 rows, single (partial) 128-lane block.
    B1, V1 = 2, 16
    coords1 = jax.random.normal(k_c1, (B1, V1, position_dim), jnp.float32)
    out1 = jax.block_until_ready(rff_position_encode(coords1, gaussian_vectors))
    ref1 = rff_reference(coords1, gaussian_vectors)
    assert out1.shape == (B1, V1, encoding_dim), out1.shape
    assert jnp.allclose(out1, ref1, atol=1e-5, rtol=1e-5), "mismatch vs reference (case 1)"

    # Case 2: 300 rows -> 2 grid steps (256-lane tiles) with a masked partial edge block.
    B2, V2 = 3, 100
    coords2 = jax.random.normal(k_c2, (B2, V2, position_dim), jnp.float32)
    out2 = jax.block_until_ready(rff_position_encode(coords2, gaussian_vectors))
    ref2 = rff_reference(coords2, gaussian_vectors)
    assert out2.shape == (B2, V2, encoding_dim), out2.shape
    assert jnp.allclose(out2, ref2, atol=1e-5, rtol=1e-5), "mismatch vs reference (case 2)"

    # Case 3: 2048 rows -> 2 aligned 1024-lane tiles (exercises the >=2-block split).
    B3, V3 = 4, 512
    coords3 = jax.random.normal(k_c3, (B3, V3, position_dim), jnp.float32)
    out3 = jax.block_until_ready(rff_position_encode(coords3, gaussian_vectors))
    ref3 = rff_reference(coords3, gaussian_vectors)
    assert out3.shape == (B3, V3, encoding_dim), out3.shape
    assert jnp.allclose(out3, ref3, atol=1e-5, rtol=1e-5), "mismatch vs reference (case 3)"

    print("KERNEL_OK")
</pallas_src>

<mosaic_0001>
module attributes {stable_mosaic.version = 11 : i64} {
  func.func @_rff_kernel(%arg0: i32, %arg1: memref<16x3xf32, #tpu.memory_space<vmem>>, %arg2: memref<3x128xf32, #tpu.memory_space<vmem>>, %arg3: memref<128x32xf32, #tpu.memory_space<vmem>>) attributes {dimension_semantics = [#tpu.dimension_semantics<parallel>], iteration_bounds = array<i64: 1>, scalar_prefetch = 0 : i64, scratch_operands = 0 : i64, tpu.core_type = #tpu.core_type<tc>, window_params = [{pipeline_mode = #tpu.pipeline_mode<synchronous>, transform_indices = @transform_0, window_bounds = array<i64: 16, 3>}, {transform_indices = @transform_1, window_bounds = array<i64: 3, 128>}, {transform_indices = @transform_2, window_bounds = array<i64: 128, 32>}]} {
    %c0 = arith.constant 0 : index
    %c0_0 = arith.constant 0 : index
    %0 = vector.load %arg1[%c0, %c0_0] : memref<16x3xf32, #tpu.memory_space<vmem>>, vector<16x3xf32>
    %c0_1 = arith.constant 0 : index
    %c0_2 = arith.constant 0 : index
    %1 = vector.load %arg2[%c0_1, %c0_2] : memref<3x128xf32, #tpu.memory_space<vmem>>, vector<3x128xf32>
    %2 = vector.extract_strided_slice %0 {offsets = [0, 0], sizes = [16, 1], strides = [1, 1]} : vector<16x3xf32> to vector<16x1xf32>
    %3 = vector.extract_strided_slice %1 {offsets = [0, 0], sizes = [1, 128], strides = [1, 1]} : vector<3x128xf32> to vector<1x128xf32>
    %4 = vector.broadcast %2 : vector<16x1xf32> to vector<16x128xf32>
    %5 = vector.broadcast %3 : vector<1x128xf32> to vector<16x128xf32>
    %6 = arith.mulf %4, %5 : vector<16x128xf32>
    %7 = vector.extract_strided_slice %0 {offsets = [0, 1], sizes = [16, 1], strides = [1, 1]} : vector<16x3xf32> to vector<16x1xf32>
    %8 = vector.extract_strided_slice %1 {offsets = [1, 0], sizes = [1, 128], strides = [1, 1]} : vector<3x128xf32> to vector<1x128xf32>
    %9 = vector.broadcast %7 : vector<16x1xf32> to vector<16x128xf32>
    %10 = vector.broadcast %8 : vector<1x128xf32> to vector<16x128xf32>
    %11 = arith.mulf %9, %10 : vector<16x128xf32>
    %12 = arith.addf %6, %11 : vector<16x128xf32>
    %13 = vector.extract_strided_slice %0 {offsets = [0, 2], sizes = [16, 1], strides = [1, 1]} : vector<16x3xf32> to vector<16x1xf32>
    %14 = vector.extract_strided_slice %1 {offsets = [2, 0], sizes = [1, 128], strides = [1, 1]} : vector<3x128xf32> to vector<1x128xf32>
    %15 = vector.broadcast %13 : vector<16x1xf32> to vector<16x128xf32>
    %16 = vector.broadcast %14 : vector<1x128xf32> to vector<16x128xf32>
    %17 = arith.mulf %15, %16 : vector<16x128xf32>
    %18 = arith.addf %12, %17 : vector<16x128xf32>
    %cst = arith.constant 0.636619746 : f32
    %19 = vector.broadcast %cst : f32 to vector<16x128xf32>
    %20 = arith.mulf %18, %19 : vector<16x128xf32>
    %cst_3 = arith.constant 5.000000e-01 : f32
    %21 = vector.broadcast %cst_3 : f32 to vector<16x128xf32>
    %22 = arith.addf %20, %21 : vector<16x128xf32>
    %23 = math.floor %22 : vector<16x128xf32>
    %cst_4 = arith.constant 1.5703125 : f32
    %24 = vector.broadcast %cst_4 : f32 to vector<16x128xf32>
    %25 = arith.mulf %23, %24 : vector<16x128xf32>
    %26 = arith.subf %18, %25 : vector<16x128xf32>
    %cst_5 = arith.constant 4.83751297E-4 : f32
    %27 = vector.broadcast %cst_5 : f32 to vector<16x128xf32>
    %28 = arith.mulf %23, %27 : vector<16x128xf32>
    %29 = arith.subf %26, %28 : vector<16x128xf32>
    %cst_6 = arith.constant 7.549790e-08 : f32
    %30 = vector.broadcast %cst_6 : f32 to vector<16x128xf32>
    %31 = arith.mulf %23, %30 : vector<16x128xf32>
    %32 = arith.subf %29, %31 : vector<16x128xf32>
    %33 = arith.mulf %32, %32 : vector<16x128xf32>
    %cst_7 = arith.constant -1.95152956E-4 : f32
    %34 = vector.broadcast %cst_7 : f32 to vector<16x128xf32>
    %35 = arith.mulf %34, %33 : vector<16x128xf32>
    %cst_8 = arith.constant 0.00833216123 : f32
    %36 = vector.broadcast %cst_8 : f32 to vector<16x128xf32>
    %37 = arith.addf %35, %36 : vector<16x128xf32>
    %38 = arith.mulf %37, %33 : vector<16x128xf32>
    %cst_9 = arith.constant -0.166666552 : f32
    %39 = vector.broadcast %cst_9 : f32 to vector<16x128xf32>
    %40 = arith.addf %38, %39 : vector<16x128xf32>
    %41 = arith.mulf %33, %40 : vector<16x128xf32>
    %42 = arith.mulf %32, %41 : vector<16x128xf32>
    %43 = arith.addf %32, %42 : vector<16x128xf32>
    %cst_10 = arith.constant 2.44331568E-5 : f32
    %44 = vector.broadcast %cst_10 : f32 to vector<16x128xf32>
    %45 = arith.mulf %44, %33 : vector<16x128xf32>
    %cst_11 = arith.constant -0.00138873165 : f32
    %46 = vector.broadcast %cst_11 : f32 to vector<16x128xf32>
    %47 = arith.addf %45, %46 : vector<16x128xf32>
    %48 = arith.mulf %47, %33 : vector<16x128xf32>
    %cst_12 = arith.constant 0.0416666456 : f32
    %49 = vector.broadcast %cst_12 : f32 to vector<16x128xf32>
    %50 = arith.addf %48, %49 : vector<16x128xf32>
    %cst_13 = arith.constant 5.000000e-01 : f32
    %51 = vector.broadcast %cst_13 : f32 to vector<16x128xf32>
    %52 = arith.mulf %51, %33 : vector<16x128xf32>
    %cst_14 = arith.constant 1.000000e+00 : f32
    %53 = vector.broadcast %cst_14 : f32 to vector<16x128xf32>
    %54 = arith.subf %53, %52 : vector<16x128xf32>
    %55 = arith.mulf %33, %33 : vector<16x128xf32>
    %56 = arith.mulf %55, %50 : vector<16x128xf32>
    %57 = arith.addf %54, %56 : vector<16x128xf32>
    %cst_15 = arith.constant 2.500000e-01 : f32
    %58 = vector.broadcast %cst_15 : f32 to vector<16x128xf32>
    %59 = arith.mulf %23, %58 : vector<16x128xf32>
    %60 = math.floor %59 : vector<16x128xf32>
    %cst_16 = arith.constant 4.000000e+00 : f32
    %61 = vector.broadcast %cst_16 : f32 to vector<16x128xf32>
    %62 = arith.mulf %61, %60 : vector<16x128xf32>
    %63 = arith.subf %23, %62 : vector<16x128xf32>
    %cst_17 = arith.constant 1.000000e+00 : f32
    %64 = vector.broadcast %cst_17 : f32 to vector<16x128xf32>
    %65 = arith.cmpf oeq, %63, %64 : vector<16x128xf32>
    %cst_18 = arith.constant 3.000000e+00 : f32
    %66 = vector.broadcast %cst_18 : f32 to vector<16x128xf32>
    %67 = arith.cmpf oeq, %63, %66 : vector<16x128xf32>
    %68 = arith.ori %65, %67 : vector<16x128xi1>
    %cst_19 = arith.constant 2.000000e+00 : f32
    %69 = vector.broadcast %cst_19 : f32 to vector<16x128xf32>
    %70 = arith.cmpf oge, %63, %69 : vector<16x128xf32>
    %cst_20 = arith.constant 1.000000e+00 : f32
    %71 = vector.broadcast %cst_20 : f32 to vector<16x128xf32>
    %72 = arith.cmpf oeq, %63, %71 : vector<16x128xf32>
    %cst_21 = arith.constant 2.000000e+00 : f32
    %73 = vector.broadcast %cst_21 : f32 to vector<16x128xf32>
    %74 = arith.cmpf oeq, %63, %73 : vector<16x128xf32>
    %75 = arith.ori %72, %74 : vector<16x128xi1>
    %cst_22 = arith.constant -2.500000e-01 : f32
    %cst_23 = arith.constant 2.500000e-01 : f32
    %76 = vector.broadcast %cst_22 : f32 to vector<16x128xf32>
    %77 = vector.broadcast %cst_23 : f32 to vector<16x128xf32>
    %78 = arith.select %70, %76, %77 : vector<16x128xi1>, vector<16x128xf32>
    %cst_24 = arith.constant -2.500000e-01 : f32
    %cst_25 = arith.constant 2.500000e-01 : f32
    %79 = vector.broadcast %cst_24 : f32 to vector<16x128xf32>
    %80 = vector.broadcast %cst_25 : f32 to vector<16x128xf32>
    %81 = arith.select %75, %79, %80 : vector<16x128xi1>, vector<16x128xf32>
    %82 = arith.select %68, %57, %43 : vector<16x128xi1>, vector<16x128xf32>
    %83 = arith.mulf %78, %82 : vector<16x128xf32>
    %84 = arith.select %68, %43, %57 : vector<16x128xi1>, vector<16x128xf32>
    %85 = arith.mulf %81, %84 : vector<16x128xf32>
    %86 = tpu.concatenate %85, %83 in 0 : vector<16x128xf32>, vector<16x128xf32> -> vector<32x128xf32>
    %87 = tpu.transpose %86, [1, 0] : vector<32x128xf32> -> vector<128x32xf32>
    %c0_26 = arith.constant 0 : index
    %c0_27 = arith.constant 0 : index
    %88 = vector.load %arg3[%c0_26, %c0_27] : memref<128x32xf32, #tpu.memory_space<vmem>>, vector<128x32xf32>
    tpu.vector_store %arg3[%c0_26, %c0_27], %87 {strides = array<i32>} : memref<128x32xf32, #tpu.memory_space<vmem>>, vector<128x32xf32>,
    return
  }
  func.func @transform_0(%arg0: i32) -> (i32, i32) {
    %c0_i32 = arith.constant 0 : i32
    %c0_i32_0 = arith.constant 0 : i32
    %c0_i32_1 = arith.constant 0 : i32
    return %c0_i32, %c0_i32_0 : i32, i32
  }
  func.func @transform_1(%arg0: i32) -> (i32, i32) {
    %c0_i32 = arith.constant 0 : i32
    %c0_i32_0 = arith.constant 0 : i32
    return %c0_i32, %arg0 : i32, i32
  }
  func.func @transform_2(%arg0: i32) -> (i32, i32) {
    %c0_i32 = arith.constant 0 : i32
    %c0_i32_0 = arith.constant 0 : i32
    return %arg0, %c0_i32 : i32, i32
  }
}

</mosaic_0001>

<llo_original>
// kernel: tpu_custom_call.1
$region0: #{tpu_custom_call.1}
  #allocation0 [shape = 'u32[]', space=smem, size = 0x4, offset = 0x4, fixed_abs, tag = 'smem constant byte address 0x4 - core index']
  #allocation1 [shape = 'u32[72,128]{1,0:T(1,128)}', space=vmem, size = 0x9000, scoped, tag = 'internal scratch']
  %s0 = inlined_call_operand.vmem [shape: f32[16,3], index: 0, kind: input, shape index: {}]
  %s1 = inlined_call_operand.vmem [shape: f32[3,32], index: 1, kind: input, shape index: {}]
  %s2 = inlined_call_operand.hbm [shape: f32[32,32], index: 2, kind: output, shape index: {}]
  %s3 = sld [smem:[#allocation0]]
  $region18: #{tpu_custom_call.1} parent=0
    _
  %s5 = ssub.s32 1, %s3
  %s6 = scalar_select 0, %s5, %s3
  $region1: #{tpu_custom_call.1} parent=0
    #allocation2 [shape = 'u8[65536]{0}', space=vmem, size = 0x10000, scoped, tag = 'output window, operand 0, single buffered']
    #allocation3 [shape = 's32[1]{0}', space=sflag, size = 0x4, scoped, tag = 'scoped memory for tpu_custom_call.1']
    %7 = vsyncpa [#allocation3], 0
    // Predicated region
    $region2: #{tpu_custom_call.1} parent=1 // pred_check
      _
    $region3: #{tpu_custom_call.1} parent=1 // pred_check_branch
      %9 = sbr.rel (0) target = $region5
    $region4: #{tpu_custom_call.1} parent=1 // pred_region
      _
    $region5: #{tpu_custom_call.1} parent=1 // pred_fallthru
      _
    // Predicated region
    $region6: #{tpu_custom_call.1} parent=1 // pred_check
      _
    $region7: #{tpu_custom_call.1} parent=1 // pred_check_branch
      %11 = sbr.rel (0) target = $region9
    $region8: #{tpu_custom_call.1} parent=1 // pred_region
      _
    $region9: #{tpu_custom_call.1} parent=1 // pred_fallthru
      _
    %v12 = vld [vmem:[%s0] sm:$0xff]
    %v13 = vld [vmem:[%s0 + $0x8] sm:$0xff]
    %v14 = vld [vmem:[%s1] sm:$0x7]
    %16 = vset.pattern.permute.xlu0 0
    %17 = vperm.xlu0 %16, %v12
    %v18 = vpop.permute.xlu0 %17
    %21 = vset.pattern.permute.xlu0 0
    %22 = vperm.xlu0 %21, %v13
    %v23 = vpop.permute.xlu0 %22
    %v25 = vperm.slane %v14, 0
    %v26 = vmul.f32 %v18, %v25
    %v27 = vmul.f32 %v23, %v25
    %28 = vset.pattern.permute.xlu0 1
    %29 = vperm.xlu0 %28, %v12
    %v30 = vpop.permute.xlu0 %29
    %32 = vset.pattern.permute.xlu0 1
    %33 = vperm.xlu0 %32, %v13
    %v34 = vpop.permute.xlu0 %33
    %v36 = vperm.slane %v14, 1
    %v37 = vmul.f32 %v30, %v36
    %v38 = vmul.f32 %v34, %v36
    %v39 = vadd.f32 %v26, %v37
    %v40 = vadd.f32 %v27, %v38
    %41 = vset.pattern.permute.xlu0 2
    %42 = vperm.xlu0 %41, %v12
    %v43 = vpop.permute.xlu0 %42
    %45 = vset.pattern.permute.xlu0 2
    %46 = vperm.xlu0 %45, %v13
    %v47 = vpop.permute.xlu0 %46
    %v49 = vperm.slane %v14, 2
    %v50 = vmul.f32 %v43, %v49
    %v51 = vmul.f32 %v47, %v49
    %v52 = vadd.f32 %v39, %v50
    %v53 = vadd.f32 %v40, %v51
    %v54 = vmul.f32 %v52, 0.63661975
    %v55 = vmul.f32 %v53, 0.63661975
    %v56 = vadd.f32 %v54, 0.5
    %v57 = vadd.f32 %v55, 0.5
    %v58 = vfloor.f32 %v56
    %v59 = vfloor.f32 %v57
    %v60 = vmul.f32 %v58, 1.5703125
    %v61 = vmul.f32 %v59, 1.5703125
    %v62 = vsub.f32 %v52, %v60
    %v63 = vsub.f32 %v53, %v61
    %v64 = vmul.f32 %v58, 0.0004837513
    %v65 = vmul.f32 %v59, 0.0004837513
    %v66 = vsub.f32 %v62, %v64
    %v67 = vsub.f32 %v63, %v65
    %v68 = vmul.f32 %v58, 7.54979e-08
    %v69 = vmul.f32 %v59, 7.54979e-08
    %v70 = vsub.f32 %v66, %v68
    %v71 = vsub.f32 %v67, %v69
    %v72 = vmul.f32 %v70, %v70
    %v73 = vmul.f32 %v71, %v71
    %v74 = vmul.f32 %v72, -0.00019515296
    %v75 = vmul.f32 %v73, -0.00019515296
    %v76 = vadd.f32 %v74, 0.008332161
    %v77 = vadd.f32 %v75, 0.008332161
    %v78 = vmul.f32 %v76, %v72
    %v79 = vmul.f32 %v77, %v73
    %v80 = vadd.f32 %v78, -0.16666655
    %v81 = vadd.f32 %v79, -0.16666655
    %v82 = vmul.f32 %v72, %v80
    %v83 = vmul.f32 %v73, %v81
    %v84 = vmul.f32 %v70, %v82
    %v85 = vmul.f32 %v71, %v83
    %v86 = vadd.f32 %v70, %v84
    %v87 = vadd.f32 %v71, %v85
    %v88 = vmul.f32 %v72, 2.4433157e-05
    %v89 = vmul.f32 %v73, 2.4433157e-05
    %v90 = vadd.f32 %v88, -0.0013887316
    %v91 = vadd.f32 %v89, -0.0013887316
    %v92 = vmul.f32 %v90, %v72
    %v93 = vmul.f32 %v91, %v73
    %v94 = vadd.f32 %v92, 0.041666646
    %v95 = vadd.f32 %v93, 0.041666646
    %v96 = vmul.f32 %v72, 0.5
    %v97 = vmul.f32 %v73, 0.5
    %v98 = vsub.f32 1.0, %v96
    %v99 = vsub.f32 1.0, %v97
    %v100 = vmul.f32 %v72, %v72
    %v101 = vmul.f32 %v73, %v73
    %v102 = vmul.f32 %v100, %v94
    %v103 = vmul.f32 %v101, %v95
    %v104 = vadd.f32 %v98, %v102
    %v105 = vadd.f32 %v99, %v103
    %v106 = vmul.f32 %v58, 0.25
    %v107 = vmul.f32 %v59, 0.25
    %v108 = vfloor.f32 %v106
    %v109 = vfloor.f32 %v107
    %v110 = vmul.f32 %v108, 4.0
    %v111 = vmul.f32 %v109, 4.0
    %v112 = vsub.f32 %v58, %v110
    %v113 = vsub.f32 %v59, %v111
    %vm114 = vcmp.eq.f32.partialorder %v112, 1.0
    %vm115 = vcmp.eq.f32.partialorder %v113, 1.0
    %vm116 = vcmp.eq.f32.partialorder %v112, 3.0
    %vm117 = vcmp.eq.f32.partialorder %v113, 3.0
    %vm118 = vmor %vm114, %vm116
    %vm119 = vmor %vm115, %vm117
    %vm120 = vcmp.ge.f32.partialorder %v112, 2.0
    %vm121 = vcmp.ge.f32.partialorder %v113, 2.0
    %vm122 = vcmp.eq.f32.partialorder %v112, 2.0
    %vm123 = vcmp.eq.f32.partialorder %v113, 2.0
    %vm124 = vmor %vm114, %vm122
    %vm125 = vmor %vm115, %vm123
    %v126 = vsel %vm120, -0.25, 0.25
    %v127 = vsel %vm121, -0.25, 0.25
    %v128 = vsel %vm124, -0.25, 0.25
    %v129 = vsel %vm125, -0.25, 0.25
    %v130 = vsel %vm118, %v104, %v86
    %v131 = vsel %vm119, %v105, %v87
    %v132 = vmul.f32 %v126, %v130
    %v133 = vmul.f32 %v127, %v131
    %v134 = vsel %vm118, %v86, %v104
    %v135 = vsel %vm119, %v87, %v105
    %v136 = vmul.f32 %v128, %v134
    %v137 = vmul.f32 %v129, %v135
    %138 = vxpose.xlu0.b32.start [1/16] %v136, 128
    %139 = vxpose.xlu0.b32.cont [2/16] %v137, 128
    %140 = vxpose.xlu0.b32.cont [3/16] %v132, 128
    %141 = vxpose.xlu0.b32.cont [4/16] %v133, 128
    %142 = vxpose.xlu0.b32.cont [5/16] 0.0, 128
    %143 = vxpose.xlu0.b32.cont [6/16] 0.0, 128
    %144 = vxpose.xlu0.b32.cont [7/16] 0.0, 128
    %145 = vxpose.xlu0.b32.cont [8/16] 0.0, 128
    %146 = vxpose.xlu0.b32.cont [9/16] 0.0, 128
    %147 = vxpose.xlu0.b32.cont [10/16] 0.0, 128
    %148 = vxpose.xlu0.b32.cont [11/16] 0.0, 128
    %149 = vxpose.xlu0.b32.cont [12/16] 0.0, 128
    %150 = vxpose.xlu0.b32.cont [13/16] 0.0, 128
    %151 = vxpose.xlu0.b32.cont [14/16] 0.0, 128
    %152 = vxpose.xlu0.b32.cont [15/16] 0.0, 128
    %153 = vxpose.xlu0.b32.end [16/16] 0.0, 128
    %v154 = vpop.trf.xlu0
    %v155 = vpop.trf.xlu0
    %v156 = vpop.trf.xlu0
    %v157 = vpop.trf.xlu0
    %v158 = vpop.trf.xlu0
    %v159 = vpop.trf.xlu0
    %v160 = vpop.trf.xlu0
    %v161 = vpop.trf.xlu0
    %v162 = vpop.trf.xlu0
    %v163 = vpop.trf.xlu0
    %v164 = vpop.trf.xlu0
    %v165 = vpop.trf.xlu0
    %v166 = vpop.trf.xlu0
    %v167 = vpop.trf.xlu0
    %v168 = vpop.trf.xlu0
    %v169 = vpop.trf.xlu0
    %vm170 = vcmask 261120
    %171 = vst.msk [vmem:[#allocation2] sm:$0xff] %vm170, %v154
    %172 = vst.msk [vmem:[#allocation2 + $0x8] sm:$0xff] %vm170, %v155
    %173 = vst.msk [vmem:[#allocation2 + $0x10] sm:$0xff] %vm170, %v156
    %174 = vst.msk [vmem:[#allocation2 + $0x18] sm:$0xff] %vm170, %v157
    %175 = vst.msk [vmem:[#allocation2 + $0x20] sm:$0xff] %vm170, %v158
    %176 = vst.msk [vmem:[#allocation2 + $0x28] sm:$0xff] %vm170, %v159
    %177 = vst.msk [vmem:[#allocation2 + $0x30] sm:$0xff] %vm170, %v160
    %178 = vst.msk [vmem:[#allocation2 + $0x38] sm:$0xff] %vm170, %v161
    %179 = vst.msk [vmem:[#allocation2 + $0x40] sm:$0xff] %vm170, %v162
    %180 = vst.msk [vmem:[#allocation2 + $0x48] sm:$0xff] %vm170, %v163
    %181 = vst.msk [vmem:[#allocation2 + $0x50] sm:$0xff] %vm170, %v164
    %182 = vst.msk [vmem:[#allocation2 + $0x58] sm:$0xff] %vm170, %v165
    %183 = vst.msk [vmem:[#allocation2 + $0x60] sm:$0xff] %vm170, %v166
    %184 = vst.msk [vmem:[#allocation2 + $0x68] sm:$0xff] %vm170, %v167
    %185 = vst.msk [vmem:[#allocation2 + $0x70] sm:$0xff] %vm170, %v168
    %186 = vst.msk [vmem:[#allocation2 + $0x78] sm:$0xff] %vm170, %v169
    // Predicated region
    $region10: #{tpu_custom_call.1} parent=1 // pred_check
      _
    $region11: #{tpu_custom_call.1} parent=1 // pred_check_branch
      %188 = sbr.rel (0) target = $region13
    $region12: #{tpu_custom_call.1} parent=1 // pred_region
      %190 = vsyncadd [#allocation3], 1536
      %s191 = sshll.u32 [#allocation2], 4
      %s192 = int_to_ptr.vmem [resolvable:$true] %s191
      %s193 = sshll.u32 %s2, 4
      %s194 = int_to_ptr.hbm [resolvable:$true] %s193
      %199 = dma.vmem_to_hbm [thread:$0]  %s192, 512, %s194, [#allocation3], 128, 128, 8
    $region13: #{tpu_custom_call.1} parent=1 // pred_fallthru
      _
    // Predicated region
    $region14: #{tpu_custom_call.1} parent=1 // pred_check
      _
    $region15: #{tpu_custom_call.1} parent=1 // pred_check_branch
      %201 = sbr.rel (0) target = $region17
    $region16: #{tpu_custom_call.1} parent=1 // pred_region
      %203 = dma.done [#allocation3], 2048
    $region17: #{tpu_custom_call.1} parent=1 // pred_fallthru
      _
    %204 = vsyncpa [#allocation3], 1

</llo_original>
